<compile_context>
chip_gen: v5e
topology: v5e:2x2
jax: 0.10.0
libtpu: 0.0.40
codegen_flags: <defaults>
</compile_context>

<pallas_src>
import math
from functools import partial

import jax
import jax.numpy as jnp
from jax import lax
from jax.experimental import pallas as pl
from jax.experimental.pallas import tpu as pltpu

# ----------------------- model / layout constants --------------------------
H = W = 28            # input spatial size (required by fc1 = 16*7*7)
GRID = 32             # padded spatial grid; 32*32 = 1024 lanes (multiple of 128)
NLANES = GRID * GRID
C1, C2 = 8, 16        # conv1 / conv2 output channels
HP = WP = 14          # spatial size after pool1
HQ = WQ = 7           # spatial size after pool2

# lane offsets of the 3x3 taps:
#   conv1 acts on the dense 32x32 grid              -> (dy-1)*32 + (dx-1)
#   conv2 acts on pool1 "parked" positions (stride2) -> (dy-1)*64 + (dx-1)*2
OFF1 = tuple((dy - 1) * GRID + (dx - 1) for dy in range(3) for dx in range(3))
OFF2 = tuple((dy - 1) * 2 * GRID + (dx - 1) * 2
             for dy in range(3) for dx in range(3))


# -------------------- pltpu.roll semantics probe (once) --------------------
_ROLL_NUMPY = None


def _roll_probe_kernel(x_ref, o_ref):
    o_ref[...] = pltpu.roll(x_ref[...], 1, 1)


def _roll_follows_numpy():
    """True iff pltpu.roll(x, s)[..., i] == x[..., i - s] (jnp.roll semantics)."""
    global _ROLL_NUMPY
    if _ROLL_NUMPY is None:
        x = jnp.broadcast_to(jnp.arange(128, dtype=jnp.float32), (8, 128))
        out = pl.pallas_call(
            _roll_probe_kernel,
            out_shape=jax.ShapeDtypeStruct((8, 128), jnp.float32),
        )(x)
        _ROLL_NUMPY = bool(jax.device_get(out)[0, 0] == 127.0)
    return _ROLL_NUMPY


def _shift(v, off, roll_numpy):
    """result[..., i] = v[..., i + off]  (wrapped positions are never consumed)."""
    if off == 0:
        return v
    s = (-off) if roll_numpy else off
    return pltpu.roll(v, s % NLANES, 1)


# ------------------------------ fused kernel --------------------------------
def _cnn_kernel(x_ref, w1_ref, b1_ref, w2_ref, b2_ref, wf_ref, bf_ref,
                o_ref, p1_ref, *, bt, cin, ncls, roll_numpy):
    f32 = jnp.float32
    sh = partial(_shift, roll_numpy=roll_numpy)

    # mask of pool1 "parked" positions P1(i,j) = (2i+1)*32 + (2j+1), i,j in [0,14)
    lane = lax.broadcasted_iota(jnp.int32, (bt, NLANES), 1)
    row, col = lane // GRID, lane % GRID
    p1_mask = (((row % 2) == 1) & (row < 2 * HP)
               & ((col % 2) == 1) & (col < 2 * WP))

    # ---- stage 1: conv1 (cin -> 8, 3x3, pad 1) + relu + 2x2 maxpool ---------
    def stage1(co, carry):
        acc = jnp.zeros((bt, NLANES), f32)
        for ci in range(cin):
            v = x_ref[:, ci, :]                       # (bt, 1024), zero-padded
            for t in range(9):
                acc = acc + w1_ref[co, ci * 9 + t] * sh(v, OFF1[t])
        y = jnp.maximum(acc + b1_ref[co], 0.0)        # bias + relu
        z = jnp.maximum(y, sh(y, 1))                  # 2x2 maxpool via roll+max
        z = jnp.maximum(z, sh(z, GRID))
        p1_ref[co] = jnp.where(p1_mask, z, 0.0)       # keep only parked positions
        return carry

    lax.fori_loop(0, C1, stage1, 0)

    # ---- stage 2: conv2 (8 -> 16) + relu + 2x2 maxpool + fc -----------------
    def stage2(co, out):
        acc = jnp.zeros((bt, NLANES), f32)
        for ci in range(C1):
            v = p1_ref[ci]
            for t in range(9):
                acc = acc + w2_ref[co, ci * 9 + t] * sh(v, OFF2[t])
        y = jnp.maximum(acc + b2_ref[co], 0.0)        # bias + relu
        z = jnp.maximum(y, sh(y, 2))                  # 2x2 maxpool on parked grid
        z = jnp.maximum(z, sh(z, 2 * GRID))
        # fc contribution of this channel (MXU); non-pooled lanes hit zero rows.
        out = out + lax.dot_general(
            z, wf_ref[co],
            dimension_numbers=(((1,), (1,)), ((), ())),
            preferred_element_type=f32)
        return out

    out = lax.fori_loop(0, C2, stage2, jnp.zeros((bt, ncls), jnp.float32))
    o_ref[...] = out + bf_ref[...]


# ------------------------------- wrapper ------------------------------------
@partial(jax.jit, static_argnames=("block_b", "roll_numpy"))
def _cnn_forward_impl(x_nchw, kparams, block_b, roll_numpy):
    B, cin, h, w = x_nchw.shape
    if (h, w) != (H, W):
        raise ValueError(f"expected {H}x{W} spatial input, got {h}x{w}")
    ncls = kparams["wfk"].shape[1]

    # embed each image into the flat zero-padded 32x32 grid (lane-dense input)
    xg = jnp.pad(x_nchw.astype(jnp.float32),
                 ((0, 0), (0, 0), (1, GRID - 1 - H), (1, GRID - 1 - W)))
    xg = xg.reshape(B, cin, NLANES)

    bt = max(1, min(block_b, B))          # images per grid step
    nblk = -(-B // bt)
    bp = nblk * bt
    if bp != B:                            # pad batch to a multiple of the tile
        xg = jnp.pad(xg, ((0, bp - B), (0, 0), (0, 0)))

    kernel = partial(_cnn_kernel, bt=bt, cin=cin, ncls=ncls,
                     roll_numpy=roll_numpy)
    out = pl.pallas_call(
        kernel,
        out_shape=jax.ShapeDtypeStruct((bp, ncls), jnp.float32),
        grid=(nblk,),
        in_specs=[
            pl.BlockSpec((bt, cin, NLANES), lambda i: (i, 0, 0)),   # activations
            pl.BlockSpec(memory_space=pltpu.MemorySpace.SMEM),      # w1 (8, cin*9)
            pl.BlockSpec(memory_space=pltpu.MemorySpace.SMEM),      # b1 (8,)
            pl.BlockSpec(memory_space=pltpu.MemorySpace.SMEM),      # w2 (16, 72)
            pl.BlockSpec(memory_space=pltpu.MemorySpace.SMEM),      # b2 (16,)
            pl.BlockSpec((C2, ncls, NLANES), lambda i: (0, 0, 0)),  # fc W (embedded)
            pl.BlockSpec((1, ncls), lambda i: (0, 0)),              # fc bias
        ],
        out_specs=pl.BlockSpec((bt, ncls), lambda i: (i, 0)),
        scratch_shapes=[pltpu.VMEM((C1, bt, NLANES), jnp.float32)], # pool1 output
        compiler_params=pltpu.CompilerParams(
            dimension_semantics=("parallel",),    # shard batch tiles across cores
            vmem_limit_bytes=32 * 1024 * 1024,
        ),
    )(xg, kparams["w1k"], kparams["b1"], kparams["w2k"], kparams["b2"],
      kparams["wfk"], kparams["bfk"])
    return out[:B]


def cnn_forward(x_nchw, kparams, block_b=8):
    return _cnn_forward_impl(x_nchw, kparams, block_b=block_b,
                             roll_numpy=_roll_follows_numpy())


# --------------------------- params (PyTorch-style) -------------------------
def init_params(key, in_channels=1, num_classes=13):
    """PyTorch-default-style (kaiming-uniform) init, in PyTorch layouts."""
    ks = jax.random.split(key, 6)

    def u(k, shape, fan_in):
        b = 1.0 / math.sqrt(fan_in)
        return jax.random.uniform(k, shape, jnp.float32, -b, b)

    return {
        "w1": u(ks[0], (C1, in_channels, 3, 3), in_channels * 9),
        "b1": u(ks[1], (C1,), in_channels * 9),
        "w2": u(ks[2], (C2, C1, 3, 3), C1 * 9),
        "b2": u(ks[3], (C2,), C1 * 9),
        "wf": u(ks[4], (num_classes, C2 * HQ * WQ), C2 * HQ * WQ),
        "bf": u(ks[5], (num_classes,), C2 * HQ * WQ),
    }


def pack_params(p):
    """PyTorch layouts -> kernel layouts (one-time, outside the kernel)."""
    cin = p["w1"].shape[1]
    ncls = p["wf"].shape[0]
    w1k = p["w1"].reshape(C1, cin * 9)     # tap order (ci, dy, dx)
    w2k = p["w2"].reshape(C2, C1 * 9)
    # Fold PyTorch's NCHW flatten AND the pool2 parked-lane gather into the fc
    # weight: wfk[c, k, q] = wf[k, c*49 + i*7 + j] at q = (4i+1)*32 + (4j+1).
    wf = p["wf"].reshape(ncls, C2, HQ, WQ)
    qpos = ((4 * jnp.arange(HQ) + 1)[:, None] * GRID
            + (4 * jnp.arange(WQ) + 1)[None, :]).reshape(-1)
    wfk = jnp.zeros((C2, ncls, NLANES), jnp.float32)
    wfk = wfk.at[:, :, qpos].set(
        jnp.transpose(wf, (1, 0, 2, 3)).reshape(C2, ncls, HQ * WQ))
    return {"w1k": w1k, "b1": p["b1"], "w2k": w2k, "b2": p["b2"],
            "wfk": wfk, "bfk": p["bf"].reshape(1, ncls)}


# ------------------------------- reference ----------------------------------
def reference_forward(x, p):
    """Pure-JAX/XLA reference matching the PyTorch module."""
    dn = ("NCHW", "OIHW", "NCHW")
    y = lax.conv_general_dilated(x, p["w1"], (1, 1), ((1, 1), (1, 1)),
                                 dimension_numbers=dn)
    y = jnp.maximum(y + p["b1"][None, :, None, None], 0.0)
    y = lax.reduce_window(y, -jnp.inf, lax.max, (1, 1, 2, 2), (1, 1, 2, 2), "VALID")
    y = lax.conv_general_dilated(y, p["w2"], (1, 1), ((1, 1), (1, 1)),
                                 dimension_numbers=dn)
    y = jnp.maximum(y + p["b2"][None, :, None, None], 0.0)
    y = lax.reduce_window(y, -jnp.inf, lax.max, (1, 1, 2, 2), (1, 1, 2, 2), "VALID")
    y = y.reshape(y.shape[0], -1)
    return y @ p["wf"].T + p["bf"]


if __name__ == "__main__":
    key = jax.random.PRNGKey(0)
    kx, kp = jax.random.split(key)
    # 28x28 input is required so that 16*7*7 matches fc1 (as in the PyTorch module)
    x = jax.random.normal(kx, (2, 1, 28, 28), dtype=jnp.float32)   # NCHW
    params = init_params(kp, in_channels=1, num_classes=13)
    kparams = pack_params(params)

    out = cnn_forward(x, kparams)
    out = jax.block_until_ready(out)
    assert out.shape == (2, 13) and out.dtype == jnp.float32

    ref = reference_forward(x, params)
    max_err = float(jnp.max(jnp.abs(out - ref)))
    assert max_err < 2e-2, f"kernel deviates from reference: max_err={max_err}"

    print("KERNEL_OK")
</pallas_src>

<mosaic_0001>
module attributes {stable_mosaic.version = 11 : i64} {
  func.func @_roll_probe_kernel(%arg0: memref<8x128xf32, #tpu.memory_space<vmem>>, %arg1: memref<8x128xf32, #tpu.memory_space<vmem>>) attributes {dimension_semantics = [], scalar_prefetch = 0 : i64, scratch_operands = 0 : i64, tpu.core_type = #tpu.core_type<tc>} {
    %c0 = arith.constant 0 : index
    %c0_0 = arith.constant 0 : index
    %0 = vector.load %arg0[%c0, %c0_0] : memref<8x128xf32, #tpu.memory_space<vmem>>, vector<8x128xf32>
    %c1_i32 = arith.constant 1 : i32
    %1 = tpu.dynamic_rotate %0 by %c1_i32 dim 1 : vector<8x128xf32>, i32 -> vector<8x128xf32>
    %c0_1 = arith.constant 0 : index
    %c0_2 = arith.constant 0 : index
    %2 = vector.load %arg1[%c0_1, %c0_2] : memref<8x128xf32, #tpu.memory_space<vmem>>, vector<8x128xf32>
    tpu.vector_store %arg1[%c0_1, %c0_2], %1 {strides = array<i32>} : memref<8x128xf32, #tpu.memory_space<vmem>>, vector<8x128xf32>,
    return
  }
}

</mosaic_0001>

<llo_original>
// kernel: tpu_custom_call.1
$region0: #{tpu_custom_call.1}
  #allocation0 [shape = 'u32[]', space=smem, size = 0x4, offset = 0x4, fixed_abs, tag = 'smem constant byte address 0x4 - core index']
  #allocation1 [shape = 'u32[72,128]{1,0:T(1,128)}', space=vmem, size = 0x9000, scoped, tag = 'internal scratch']
  %s0 = inlined_call_operand.hbm [shape: f32[8,128], index: 0, kind: input, shape index: {}]
  %s1 = inlined_call_operand.hbm [shape: f32[8,128], index: 1, kind: output, shape index: {}]
  %s2 = sld [smem:[#allocation0]]
  $region18: #{tpu_custom_call.1} parent=0
    _
  %s4 = ssub.s32 1, %s2
  %s5 = scalar_select 0, %s4, %s2
  $region1: #{tpu_custom_call.1} parent=0
    #allocation2 [shape = 'u8[4096]{0}', space=vmem, size = 0x1000, scoped, tag = 'input window, operand 0, single buffered']
    #allocation3 [shape = 's32[1]{0}', space=sflag, size = 0x4, scoped, tag = 'scoped memory for tpu_custom_call.1']
    #allocation4 [shape = 's32[1]{0}', space=sflag, size = 0x4, scoped, tag = 'scoped memory for tpu_custom_call.1']
    #allocation5 [shape = 'u8[4096]{0}', space=vmem, size = 0x1000, scoped, tag = 'output window, operand 0, single buffered']
    %6 = vsyncpa [#allocation3], 0
    %7 = vsyncpa [#allocation4], 0
    // Predicated region
    $region2: #{tpu_custom_call.1} parent=1 // pred_check
      _
    $region3: #{tpu_custom_call.1} parent=1 // pred_check_branch
      %9 = sbr.rel (0) target = $region5
    $region4: #{tpu_custom_call.1} parent=1 // pred_region
      %11 = vsyncadd [#allocation3], 0
      %s13 = sshll.u32 %s0, 4
      %s14 = int_to_ptr.hbm [resolvable:$true] %s13
      %s15 = sshll.u32 [#allocation2], 4
      %s16 = int_to_ptr.vmem [resolvable:$true] %s15
      %18 = dma.hbm_to_vmem [thread:$0]  %s14, 128, %s16, [#allocation3]
    $region5: #{tpu_custom_call.1} parent=1 // pred_fallthru
      _
    // Predicated region
    $region6: #{tpu_custom_call.1} parent=1 // pred_check
      _
    $region7: #{tpu_custom_call.1} parent=1 // pred_check_branch
      %20 = sbr.rel (0) target = $region9
    $region8: #{tpu_custom_call.1} parent=1 // pred_region
      %22 = dma.done [#allocation3], 128
    $region9: #{tpu_custom_call.1} parent=1 // pred_fallthru
      _
    %v23 = vld [vmem:[#allocation2] sm:$0xff]
    %24 = vrot.lane.b32.xlu0 %v23, 1
    %v25 = vpop.permute.xlu0 %24
    %26 = vst [vmem:[#allocation5] sm:$0xff] %v25
    // Predicated region
    $region10: #{tpu_custom_call.1} parent=1 // pred_check
      _
    $region11: #{tpu_custom_call.1} parent=1 // pred_check_branch
      %28 = sbr.rel (0) target = $region13
    $region12: #{tpu_custom_call.1} parent=1 // pred_region
      %30 = vsyncadd [#allocation4], 0
      %s32 = sshll.u32 [#allocation5], 4
      %s33 = int_to_ptr.vmem [resolvable:$true] %s32
      %s34 = sshll.u32 %s1, 4
      %s35 = int_to_ptr.hbm [resolvable:$true] %s34
      %37 = dma.vmem_to_hbm [thread:$0]  %s33, 128, %s35, [#allocation4]
    $region13: #{tpu_custom_call.1} parent=1 // pred_fallthru
      _
    // Predicated region
    $region14: #{tpu_custom_call.1} parent=1 // pred_check
      _
    $region15: #{tpu_custom_call.1} parent=1 // pred_check_branch
      %39 = sbr.rel (0) target = $region17
    $region16: #{tpu_custom_call.1} parent=1 // pred_region
      %41 = dma.done [#allocation4], 128
    $region17: #{tpu_custom_call.1} parent=1 // pred_fallthru
      _
    %42 = vsyncpa [#allocation3], 1
    %43 = vsyncpa [#allocation4], 1

</llo_original>
